<compile_context>
chip_gen: v7x
topology: tpu7x:2x2x1
jax: 0.10.0
libtpu: 0.0.40
codegen_flags: <defaults>
</compile_context>

<pallas_src>
import functools
import math

import jax
import jax.numpy as jnp
from jax import lax
from jax.experimental import pallas as pl
from jax.experimental.pallas import tpu as pltpu


def _round_up(x: int, m: int) -> int:
    return ((x + m - 1) // m) * m


# ---------------------------------------------------------------------------
# Fast path: whole table resident in VMEM, grouped (8-row) gathers, one dense
# scale pass per (tile, E) output block.
# ---------------------------------------------------------------------------
def _embed_vmem_kernel(ids_ref, table_ref, out_ref, *, scale, tile, compute_dtype):
    base = pl.program_id(0) * tile
    group = 8                      # tile is always a multiple of 16
    n_groups = tile // group

    def gather_group(g, carry):
        off = pl.multiple_of(g * group, group)
        # 8 dynamic (1, E) row reads, concatenated along sublanes (XLU slot),
        # then a single aligned, unmasked (8, E) store.
        rows = [table_ref[pl.ds(ids_ref[base + off + t], 1), :] for t in range(group)]
        out_ref[pl.ds(off, group), :] = jnp.concatenate(rows, axis=0)
        return carry

    lax.fori_loop(0, n_groups, gather_group, 0,
                  unroll=True if n_groups <= 8 else 8)

    # One dense scale/cast pass over the full (tile, E) block (full vregs)
    # instead of per-row masked mul + casts.
    block = out_ref[...]
    out_ref[...] = (block.astype(compute_dtype) * scale).astype(out_ref.dtype)


# ---------------------------------------------------------------------------
# Large-table path: table in HBM, per-step half-tile double buffering so every
# grid step is self-contained ("parallel" => megacore-friendly on v7x).
# ---------------------------------------------------------------------------
def _embed_hbm_kernel(ids_ref, table_hbm, out_ref, buf, sems, *, scale, tile, compute_dtype):
    base = pl.program_id(0) * tile
    half = tile // 2

    def issue(h):
        off = h * half

        @pl.loop(0, half)
        def _(t):
            idx = ids_ref[base + off + t]
            pltpu.make_async_copy(table_hbm.at[idx], buf.at[h, t], sems.at[h]).start()

    # Issue all row gathers for both halves up front; half 1's DMAs overlap
    # half 0's wait + scale + store below.
    issue(0)
    issue(1)

    def finish(h):
        off = h * half
        # Aggregate wait: `half` row copies of E*itemsize bytes each landed on
        # sems[h]; one descriptor covering the whole (half, E) buffer consumes
        # the same byte count in a single wait (no per-row serialized waits).
        pltpu.make_async_copy(buf.at[h], buf.at[h], sems.at[h]).wait()
        rows = buf[h].astype(compute_dtype) * scale
        out_ref[pl.ds(off, half), :] = rows.astype(out_ref.dtype)

    finish(0)
    finish(1)


# ---------------------------------------------------------------------------
# Wrapper
# ---------------------------------------------------------------------------
def _device_info():
    kind = ""
    try:
        kind = jax.devices()[0].device_kind.lower()
    except Exception:
        pass
    is_v5 = "v5" in kind
    is_v7 = "v7" in kind
    try:
        vmem_cap = int(pltpu.get_tpu_info().vmem_capacity_bytes)
    except Exception:
        vmem_cap = (64 << 20) if is_v7 else (128 << 20)
    if is_v7:
        vmem_cap = min(vmem_cap, 64 << 20)   # 64 MiB per TensorCore on v7x
    return is_v5, is_v7, vmem_cap


def token_embedding(tokens: jax.Array, emb_table: jax.Array, *,
                    tile_tokens: int | None = None,
                    max_vmem_table_bytes: int | None = None) -> jax.Array:
    """tokens: int array [...]; emb_table: [vocab, E] -> [..., E] scaled by sqrt(E)."""
    vocab, E = emb_table.shape
    lead_shape = tuple(tokens.shape)
    n_tok = int(math.prod(lead_shape))
    itemsize = jnp.dtype(emb_table.dtype).itemsize
    scale = float(math.sqrt(E))

    ids = jnp.clip(tokens.reshape(n_tok).astype(jnp.int32), 0, vocab - 1)

    is_v5, is_v7, vmem_cap = _device_info()

    pad_cols = _round_up(E, 128)
    row_bytes = pad_cols * itemsize
    padded_table_bytes = _round_up(vocab, 8) * row_bytes

    if max_vmem_table_bytes is None:
        # Single-buffered resident table (pl.Buffered(1)) -> ~70% of VMEM:
        # ~44 MiB on v7x (per TC), ~89 MiB on v5e/v6e.
        max_vmem_table_bytes = int(vmem_cap * 0.70)

    # Scale in bf16 on chips with bf16 VALUs; keep f32 math on v5e / f32 tables.
    compute_dtype = (jnp.bfloat16
                     if (emb_table.dtype == jnp.bfloat16 and not is_v5)
                     else jnp.float32)

    # Path selection: table must fit in VMEM AND the lookup volume must justify
    # streaming the whole table from HBM once (tiny tables are always resident).
    fits = padded_table_bytes <= max_vmem_table_bytes
    worth = (padded_table_bytes <= (2 << 20)) or (4 * n_tok * row_bytes >= padded_table_bytes)
    use_vmem_path = fits and worth

    # Token tile: lane/sublane-dense output blocks of ~2 MiB (v7x) / ~4 MiB (v5e/v6e).
    target_block_bytes = (2 << 20) if is_v7 else (4 << 20)
    if tile_tokens is None:
        tile = max(256, min(2048, target_block_bytes // max(row_bytes, 1)))
    else:
        tile = int(tile_tokens)
    tile = max(16, (tile // 16) * 16)
    tile = min(tile, _round_up(n_tok, 16))

    # Keep the working set inside VMEM for whichever path is taken.
    if use_vmem_path:
        budget = int(vmem_cap * 0.85) - padded_table_bytes      # table + 2x out block
        max_tile = ((budget // (2 * row_bytes)) // 16) * 16
    else:
        budget = min(vmem_cap // 2, 24 << 20)                   # (2,half,E) buf + 2x out block
        max_tile = ((budget // (3 * row_bytes)) // 16) * 16
    tile = max(16, min(tile, max(max_tile, 16)))

    n_pad = _round_up(n_tok, tile)
    if n_pad != n_tok:
        ids = jnp.concatenate([ids, jnp.zeros((n_pad - n_tok,), jnp.int32)])

    out_block_bytes = tile * row_bytes

    def run_chunk(ids_chunk):
        num_tiles = ids_chunk.shape[0] // tile
        if use_vmem_path:
            kernel = functools.partial(_embed_vmem_kernel, scale=scale, tile=tile,
                                       compute_dtype=compute_dtype)
            grid_spec = pltpu.PrefetchScalarGridSpec(
                num_scalar_prefetch=1,
                grid=(num_tiles,),
                in_specs=[pl.BlockSpec((vocab, E), lambda i, ids_r: (0, 0),
                                       pipeline_mode=pl.Buffered(1))],
                out_specs=pl.BlockSpec((tile, E), lambda i, ids_r: (i, 0)),
            )
            compiler_params = pltpu.CompilerParams(
                dimension_semantics=("parallel",),   # token tiles are independent
                vmem_limit_bytes=int(min(padded_table_bytes + 4 * out_block_bytes + (4 << 20),
                                         vmem_cap)),
            )
        else:
            kernel = functools.partial(_embed_hbm_kernel, scale=scale, tile=tile,
                                       compute_dtype=compute_dtype)
            grid_spec = pltpu.PrefetchScalarGridSpec(
                num_scalar_prefetch=1,
                grid=(num_tiles,),
                in_specs=[pl.BlockSpec(memory_space=pl.ANY)],
                out_specs=pl.BlockSpec((tile, E), lambda i, ids_r: (i, 0)),
                scratch_shapes=[
                    pltpu.VMEM((2, tile // 2, E), emb_table.dtype),
                    pltpu.SemaphoreType.DMA((2,)),
                ],
            )
            compiler_params = pltpu.CompilerParams(
                dimension_semantics=("parallel",),   # each step is self-contained
                vmem_limit_bytes=int(min(5 * out_block_bytes + (8 << 20), vmem_cap)),
            )
        return pl.pallas_call(
            kernel,
            grid_spec=grid_spec,
            out_shape=jax.ShapeDtypeStruct((ids_chunk.shape[0], E), emb_table.dtype),
            compiler_params=compiler_params,
        )(ids_chunk, emb_table)

    # Chunk the id stream so the scalar-prefetch SMEM buffer stays <= ~128 KiB.
    chunk = max(tile, (32768 // tile) * tile)
    if n_pad <= chunk:
        out_flat = run_chunk(ids)
    else:
        out_flat = jnp.concatenate(
            [run_chunk(ids[s:s + chunk]) for s in range(0, n_pad, chunk)], axis=0)

    return out_flat[:n_tok].reshape(*lead_shape, E)


if __name__ == "__main__":
    # Small, deterministic setup consistent with the module's __init__.
    vocab_size = 64
    emb_size = 128
    batch, seq = 2, 8

    key = jax.random.PRNGKey(0)
    k_emb, k_tok = jax.random.split(key)

    # Deterministic "parameters" (nn.Embedding weight ~ N(0, 1)).
    emb_table = jax.random.normal(k_emb, (vocab_size, emb_size), dtype=jnp.float32)
    tokens = jax.random.randint(k_tok, (batch, seq), 0, vocab_size, dtype=jnp.int32)

    out = token_embedding(tokens, emb_table)
    out = jax.block_until_ready(out)

    # Reference check (plain JAX): embedding lookup * sqrt(emb_size).
    ref = emb_table[tokens] * math.sqrt(emb_size)
    assert out.shape == (batch, seq, emb_size), out.shape
    assert jnp.allclose(out, ref, atol=1e-5, rtol=1e-5), "mismatch vs reference"

    # TODO(synk): nn.Embedding raises on out-of-range ids; this kernel clamps them.
    print("KERNEL_OK")
</pallas_src>

<mosaic_0001>
module attributes {stable_mosaic.version = 11 : i64} {
  func.func @_embed_vmem_kernel(%arg0: i32, %arg1: memref<16xi32, #tpu.memory_space<smem>>, %arg2: memref<64x128xf32, #tpu.memory_space<vmem>>, %arg3: memref<16x128xf32, #tpu.memory_space<vmem>>) attributes {dimension_semantics = [#tpu.dimension_semantics<parallel>], iteration_bounds = array<i64: 1>, scalar_prefetch = 1 : i64, scratch_operands = 0 : i64, tpu.core_type = #tpu.core_type<tc>, window_params = [{pipeline_mode = #tpu.pipeline_mode<synchronous>, transform_indices = @transform_0, window_bounds = array<i64: 64, 128>}, {transform_indices = @transform_1, window_bounds = array<i64: 16, 128>}]} {
    %c16_i32 = arith.constant 16 : i32
    %0 = arith.muli %arg0, %c16_i32 : i32
    %c0_i32 = arith.constant 0 : i32
    %c8_i32 = arith.constant 8 : i32
    %1 = arith.muli %c0_i32, %c8_i32 : i32
    %2 = tpu.assume_multiple %1, 8 : i32
    %3 = arith.addi %0, %2 : i32
    %c0_i32_0 = arith.constant 0 : i32
    %4 = arith.addi %3, %c0_i32_0 : i32
    %5 = arith.index_cast %4 : i32 to index
    %6 = memref.load %arg1[%5] : memref<16xi32, #tpu.memory_space<smem>>
    %7 = arith.index_cast %6 : i32 to index
    %c0 = arith.constant 0 : index
    %8 = vector.load %arg2[%7, %c0] : memref<64x128xf32, #tpu.memory_space<vmem>>, vector<1x128xf32>
    %9 = arith.addi %0, %2 : i32
    %c1_i32 = arith.constant 1 : i32
    %10 = arith.addi %9, %c1_i32 : i32
    %11 = arith.index_cast %10 : i32 to index
    %12 = memref.load %arg1[%11] : memref<16xi32, #tpu.memory_space<smem>>
    %13 = arith.index_cast %12 : i32 to index
    %c0_1 = arith.constant 0 : index
    %14 = vector.load %arg2[%13, %c0_1] : memref<64x128xf32, #tpu.memory_space<vmem>>, vector<1x128xf32>
    %15 = arith.addi %0, %2 : i32
    %c2_i32 = arith.constant 2 : i32
    %16 = arith.addi %15, %c2_i32 : i32
    %17 = arith.index_cast %16 : i32 to index
    %18 = memref.load %arg1[%17] : memref<16xi32, #tpu.memory_space<smem>>
    %19 = arith.index_cast %18 : i32 to index
    %c0_2 = arith.constant 0 : index
    %20 = vector.load %arg2[%19, %c0_2] : memref<64x128xf32, #tpu.memory_space<vmem>>, vector<1x128xf32>
    %21 = arith.addi %0, %2 : i32
    %c3_i32 = arith.constant 3 : i32
    %22 = arith.addi %21, %c3_i32 : i32
    %23 = arith.index_cast %22 : i32 to index
    %24 = memref.load %arg1[%23] : memref<16xi32, #tpu.memory_space<smem>>
    %25 = arith.index_cast %24 : i32 to index
    %c0_3 = arith.constant 0 : index
    %26 = vector.load %arg2[%25, %c0_3] : memref<64x128xf32, #tpu.memory_space<vmem>>, vector<1x128xf32>
    %27 = arith.addi %0, %2 : i32
    %c4_i32 = arith.constant 4 : i32
    %28 = arith.addi %27, %c4_i32 : i32
    %29 = arith.index_cast %28 : i32 to index
    %30 = memref.load %arg1[%29] : memref<16xi32, #tpu.memory_space<smem>>
    %31 = arith.index_cast %30 : i32 to index
    %c0_4 = arith.constant 0 : index
    %32 = vector.load %arg2[%31, %c0_4] : memref<64x128xf32, #tpu.memory_space<vmem>>, vector<1x128xf32>
    %33 = arith.addi %0, %2 : i32
    %c5_i32 = arith.constant 5 : i32
    %34 = arith.addi %33, %c5_i32 : i32
    %35 = arith.index_cast %34 : i32 to index
    %36 = memref.load %arg1[%35] : memref<16xi32, #tpu.memory_space<smem>>
    %37 = arith.index_cast %36 : i32 to index
    %c0_5 = arith.constant 0 : index
    %38 = vector.load %arg2[%37, %c0_5] : memref<64x128xf32, #tpu.memory_space<vmem>>, vector<1x128xf32>
    %39 = arith.addi %0, %2 : i32
    %c6_i32 = arith.constant 6 : i32
    %40 = arith.addi %39, %c6_i32 : i32
    %41 = arith.index_cast %40 : i32 to index
    %42 = memref.load %arg1[%41] : memref<16xi32, #tpu.memory_space<smem>>
    %43 = arith.index_cast %42 : i32 to index
    %c0_6 = arith.constant 0 : index
    %44 = vector.load %arg2[%43, %c0_6] : memref<64x128xf32, #tpu.memory_space<vmem>>, vector<1x128xf32>
    %45 = arith.addi %0, %2 : i32
    %c7_i32 = arith.constant 7 : i32
    %46 = arith.addi %45, %c7_i32 : i32
    %47 = arith.index_cast %46 : i32 to index
    %48 = memref.load %arg1[%47] : memref<16xi32, #tpu.memory_space<smem>>
    %49 = arith.index_cast %48 : i32 to index
    %c0_7 = arith.constant 0 : index
    %50 = vector.load %arg2[%49, %c0_7] : memref<64x128xf32, #tpu.memory_space<vmem>>, vector<1x128xf32>
    %51 = tpu.concatenate %8, %14, %20, %26, %32, %38, %44, %50 in 0 : vector<1x128xf32>, vector<1x128xf32>, vector<1x128xf32>, vector<1x128xf32>, vector<1x128xf32>, vector<1x128xf32>, vector<1x128xf32>, vector<1x128xf32> -> vector<8x128xf32>
    %52 = arith.index_cast %2 : i32 to index
    %c0_8 = arith.constant 0 : index
    %53 = vector.load %arg3[%52, %c0_8] : memref<16x128xf32, #tpu.memory_space<vmem>>, vector<8x128xf32>
    tpu.vector_store %arg3[%52, %c0_8], %51 {strides = array<i32>} : memref<16x128xf32, #tpu.memory_space<vmem>>, vector<8x128xf32>,
    %c1_i32_9 = arith.constant 1 : i32
    %c8_i32_10 = arith.constant 8 : i32
    %54 = arith.muli %c1_i32_9, %c8_i32_10 : i32
    %55 = tpu.assume_multiple %54, 8 : i32
    %56 = arith.addi %0, %55 : i32
    %c0_i32_11 = arith.constant 0 : i32
    %57 = arith.addi %56, %c0_i32_11 : i32
    %58 = arith.index_cast %57 : i32 to index
    %59 = memref.load %arg1[%58] : memref<16xi32, #tpu.memory_space<smem>>
    %60 = arith.index_cast %59 : i32 to index
    %c0_12 = arith.constant 0 : index
    %61 = vector.load %arg2[%60, %c0_12] : memref<64x128xf32, #tpu.memory_space<vmem>>, vector<1x128xf32>
    %62 = arith.addi %0, %55 : i32
    %c1_i32_13 = arith.constant 1 : i32
    %63 = arith.addi %62, %c1_i32_13 : i32
    %64 = arith.index_cast %63 : i32 to index
    %65 = memref.load %arg1[%64] : memref<16xi32, #tpu.memory_space<smem>>
    %66 = arith.index_cast %65 : i32 to index
    %c0_14 = arith.constant 0 : index
    %67 = vector.load %arg2[%66, %c0_14] : memref<64x128xf32, #tpu.memory_space<vmem>>, vector<1x128xf32>
    %68 = arith.addi %0, %55 : i32
    %c2_i32_15 = arith.constant 2 : i32
    %69 = arith.addi %68, %c2_i32_15 : i32
    %70 = arith.index_cast %69 : i32 to index
    %71 = memref.load %arg1[%70] : memref<16xi32, #tpu.memory_space<smem>>
    %72 = arith.index_cast %71 : i32 to index
    %c0_16 = arith.constant 0 : index
    %73 = vector.load %arg2[%72, %c0_16] : memref<64x128xf32, #tpu.memory_space<vmem>>, vector<1x128xf32>
    %74 = arith.addi %0, %55 : i32
    %c3_i32_17 = arith.constant 3 : i32
    %75 = arith.addi %74, %c3_i32_17 : i32
    %76 = arith.index_cast %75 : i32 to index
    %77 = memref.load %arg1[%76] : memref<16xi32, #tpu.memory_space<smem>>
    %78 = arith.index_cast %77 : i32 to index
    %c0_18 = arith.constant 0 : index
    %79 = vector.load %arg2[%78, %c0_18] : memref<64x128xf32, #tpu.memory_space<vmem>>, vector<1x128xf32>
    %80 = arith.addi %0, %55 : i32
    %c4_i32_19 = arith.constant 4 : i32
    %81 = arith.addi %80, %c4_i32_19 : i32
    %82 = arith.index_cast %81 : i32 to index
    %83 = memref.load %arg1[%82] : memref<16xi32, #tpu.memory_space<smem>>
    %84 = arith.index_cast %83 : i32 to index
    %c0_20 = arith.constant 0 : index
    %85 = vector.load %arg2[%84, %c0_20] : memref<64x128xf32, #tpu.memory_space<vmem>>, vector<1x128xf32>
    %86 = arith.addi %0, %55 : i32
    %c5_i32_21 = arith.constant 5 : i32
    %87 = arith.addi %86, %c5_i32_21 : i32
    %88 = arith.index_cast %87 : i32 to index
    %89 = memref.load %arg1[%88] : memref<16xi32, #tpu.memory_space<smem>>
    %90 = arith.index_cast %89 : i32 to index
    %c0_22 = arith.constant 0 : index
    %91 = vector.load %arg2[%90, %c0_22] : memref<64x128xf32, #tpu.memory_space<vmem>>, vector<1x128xf32>
    %92 = arith.addi %0, %55 : i32
    %c6_i32_23 = arith.constant 6 : i32
    %93 = arith.addi %92, %c6_i32_23 : i32
    %94 = arith.index_cast %93 : i32 to index
    %95 = memref.load %arg1[%94] : memref<16xi32, #tpu.memory_space<smem>>
    %96 = arith.index_cast %95 : i32 to index
    %c0_24 = arith.constant 0 : index
    %97 = vector.load %arg2[%96, %c0_24] : memref<64x128xf32, #tpu.memory_space<vmem>>, vector<1x128xf32>
    %98 = arith.addi %0, %55 : i32
    %c7_i32_25 = arith.constant 7 : i32
    %99 = arith.addi %98, %c7_i32_25 : i32
    %100 = arith.index_cast %99 : i32 to index
    %101 = memref.load %arg1[%100] : memref<16xi32, #tpu.memory_space<smem>>
    %102 = arith.index_cast %101 : i32 to index
    %c0_26 = arith.constant 0 : index
    %103 = vector.load %arg2[%102, %c0_26] : memref<64x128xf32, #tpu.memory_space<vmem>>, vector<1x128xf32>
    %104 = tpu.concatenate %61, %67, %73, %79, %85, %91, %97, %103 in 0 : vector<1x128xf32>, vector<1x128xf32>, vector<1x128xf32>, vector<1x128xf32>, vector<1x128xf32>, vector<1x128xf32>, vector<1x128xf32>, vector<1x128xf32> -> vector<8x128xf32>
    %105 = arith.index_cast %55 : i32 to index
    %c0_27 = arith.constant 0 : index
    %106 = vector.load %arg3[%105, %c0_27] : memref<16x128xf32, #tpu.memory_space<vmem>>, vector<8x128xf32>
    tpu.vector_store %arg3[%105, %c0_27], %104 {strides = array<i32>} : memref<16x128xf32, #tpu.memory_space<vmem>>, vector<8x128xf32>,
    %c2_i32_28 = arith.constant 2 : i32
    %c0_29 = arith.constant 0 : index
    %c0_30 = arith.constant 0 : index
    %107 = vector.load %arg3[%c0_29, %c0_30] : memref<16x128xf32, #tpu.memory_space<vmem>>, vector<16x128xf32>
    %cst = arith.constant 11.3137083 : f32
    %108 = vector.broadcast %cst : f32 to vector<16x128xf32>
    %109 = arith.mulf %107, %108 : vector<16x128xf32>
    %c0_31 = arith.constant 0 : index
    %c0_32 = arith.constant 0 : index
    %110 = vector.load %arg3[%c0_31, %c0_32] : memref<16x128xf32, #tpu.memory_space<vmem>>, vector<16x128xf32>
    tpu.vector_store %arg3[%c0_31, %c0_32], %109 {strides = array<i32>} : memref<16x128xf32, #tpu.memory_space<vmem>>, vector<16x128xf32>,
    return
  }
  func.func @transform_0(%arg0: i32, %arg1: memref<16xi32, #tpu.memory_space<smem>>) -> (i32, i32) {
    %c0_i32 = arith.constant 0 : i32
    %c0_i32_0 = arith.constant 0 : i32
    %c0_i32_1 = arith.constant 0 : i32
    return %c0_i32, %c0_i32_0 : i32, i32
  }
  func.func @transform_1(%arg0: i32, %arg1: memref<16xi32, #tpu.memory_space<smem>>) -> (i32, i32) {
    %c0_i32 = arith.constant 0 : i32
    %c0_i32_0 = arith.constant 0 : i32
    return %arg0, %c0_i32 : i32, i32
  }
}

</mosaic_0001>

<llo_original>
// kernel: tpu_custom_call.1
$region0: #{tpu_custom_call.1}
  #allocation0 [shape = 'u32[]', space=smem, size = 0x4, offset = 0x4, fixed_abs, tag = 'smem constant byte address 0x4 - core index']
  #allocation1 [shape = 'u32[144,128]{1,0:T(1,128)}', space=vmem, size = 0x12000, scoped, tag = 'internal scratch']
  #allocation2 [shape = 's32[1]{0}', space=sflag, size = 0x4, scoped, tag = 'scoped memory for tpu_custom_call.1']
  #allocation3 [shape = 'u8[512]{0}', space=smem, size = 0x200, scoped, tag = 'prefetched SMEM operand 0']
  %s0 = inlined_call_operand.hbm [shape: s32[16], index: 0, kind: input, shape index: {}]
  %s1 = inlined_call_operand.hbm [shape: f32[64,128], index: 1, kind: input, shape index: {}]
  %s2 = inlined_call_operand.hbm [shape: f32[16,128], index: 2, kind: output, shape index: {}]
  %s3 = sld [smem:[#allocation0]]
  $region18: #{tpu_custom_call.1} parent=0
    _
  %s5 = ssub.s32 1, %s3
  %s6 = scalar_select 0, %s5, %s3
  %8 = dma.hbm_to_smem %s0, 16, [#allocation3], [#allocation2]
  %9 = dma.done [#allocation2], 16
  %10 = sfence
  $region1: #{tpu_custom_call.1} parent=0
    #allocation4 [shape = 'u8[32768]{0}', space=vmem, size = 0x8000, scoped, tag = 'input window, operand 1, single buffered']
    #allocation5 [shape = 's32[1]{0}', space=sflag, size = 0x4, scoped, tag = 'scoped memory for tpu_custom_call.1']
    #allocation6 [shape = 's32[1]{0}', space=sflag, size = 0x4, scoped, tag = 'scoped memory for tpu_custom_call.1']
    #allocation7 [shape = 'u8[8192]{0}', space=vmem, size = 0x2000, scoped, tag = 'output window, operand 0, single buffered']
    %11 = vsyncpa [#allocation5], 0
    %12 = vsyncpa [#allocation6], 0
    // Predicated region
    $region2: #{tpu_custom_call.1} parent=1 // pred_check
      _
    $region3: #{tpu_custom_call.1} parent=1 // pred_check_branch
      %14 = sbr.rel (0) target = $region5
    $region4: #{tpu_custom_call.1} parent=1 // pred_region
      %s16 = ssub.s32 1024, 1024
      %17 = vsyncadd [#allocation5], %s16
      %s18 = sshll.u32 [#allocation4], 4
      %s19 = int_to_ptr.vmem [resolvable:$true] %s18
      %24 = dma.hbm_to_vmem [thread:$0]  %s1, 1024, %s19, [#allocation5], 128, 128, 8
    $region5: #{tpu_custom_call.1} parent=1 // pred_fallthru
      _
    // Predicated region
    $region6: #{tpu_custom_call.1} parent=1 // pred_check
      _
    $region7: #{tpu_custom_call.1} parent=1 // pred_check_branch
      %26 = sbr.rel (0) target = $region9
    $region8: #{tpu_custom_call.1} parent=1 // pred_region
      %27 = dma.done [#allocation5], 1024
    $region9: #{tpu_custom_call.1} parent=1 // pred_fallthru
      _
    %s28 = smul.u32 0, 16
    %s29 = sadd.s32 %s28, 0
    %s30 = sld [smem:[#allocation3 + %s29]]
    %s31 = scalar_lea.vmem [#allocation4], %s30
    %v32 = vld [vmem:[%s31] sm:$0x1]
    %s33 = sadd.s32 %s29, 1
    %s34 = sld [smem:[#allocation3 + %s33]]
    %s35 = scalar_lea.vmem [#allocation4], %s34
    %v36 = vld [vmem:[%s35] sm:$0x1]
    %s37 = sadd.s32 %s29, 2
    %s38 = sld [smem:[#allocation3 + %s37]]
    %s39 = scalar_lea.vmem [#allocation4], %s38
    %v40 = vld [vmem:[%s39] sm:$0x1]
    %s41 = sadd.s32 %s29, 3
    %s42 = sld [smem:[#allocation3 + %s41]]
    %s43 = scalar_lea.vmem [#allocation4], %s42
    %v44 = vld [vmem:[%s43] sm:$0x1]
    %s45 = sadd.s32 %s29, 4
    %s46 = sld [smem:[#allocation3 + %s45]]
    %s47 = scalar_lea.vmem [#allocation4], %s46
    %v48 = vld [vmem:[%s47] sm:$0x1]
    %s49 = sadd.s32 %s29, 5
    %s50 = sld [smem:[#allocation3 + %s49]]
    %s51 = scalar_lea.vmem [#allocation4], %s50
    %v52 = vld [vmem:[%s51] sm:$0x1]
    %s53 = sadd.s32 %s29, 6
    %s54 = sld [smem:[#allocation3 + %s53]]
    %s55 = scalar_lea.vmem [#allocation4], %s54
    %v56 = vld [vmem:[%s55] sm:$0x1]
    %s57 = sadd.s32 %s29, 7
    %s58 = sld [smem:[#allocation3 + %s57]]
    %s59 = scalar_lea.vmem [#allocation4], %s58
    %v60 = vld [vmem:[%s59] sm:$0x1]
    %v62 = vrot.slane %v36, 7
    %v65 = vrot.slane %v40, 6
    %v68 = vrot.slane %v44, 5
    %v71 = vrot.slane %v48, 4
    %v74 = vrot.slane %v52, 3
    %v77 = vrot.slane %v56, 2
    %v80 = vrot.slane %v60, 1
    %vm82 = vcmask 1040384
    %v83 = vsel %vm82, %v32, %v62
    %vm84 = vcmask 1041408
    %v85 = vsel %vm84, %v83, %v65
    %vm86 = vcmask 1042432
    %v87 = vsel %vm86, %v85, %v68
    %vm88 = vcmask 1043456
    %v89 = vsel %vm88, %v87, %v71
    %vm90 = vcmask 1044480
    %v91 = vsel %vm90, %v89, %v74
    %vm92 = vcmask 1045504
    %v93 = vsel %vm92, %v91, %v77
    %vm94 = vcmask 1046528
    %v95 = vsel %vm94, %v93, %v80
    %96 = vst [vmem:[#allocation7] sm:$0xff] %v95
    %s97 = sadd.s32 %s28, 8
    %s98 = sld [smem:[#allocation3 + %s97]]
    %s99 = scalar_lea.vmem [#allocation4], %s98
    %v100 = vld [vmem:[%s99] sm:$0x1]
    %s101 = sadd.s32 %s97, 1
    %s102 = sld [smem:[#allocation3 + %s101]]
    %s103 = scalar_lea.vmem [#allocation4], %s102
    %v104 = vld [vmem:[%s103] sm:$0x1]
    %s105 = sadd.s32 %s97, 2
    %s106 = sld [smem:[#allocation3 + %s105]]
    %s107 = scalar_lea.vmem [#allocation4], %s106
    %v108 = vld [vmem:[%s107] sm:$0x1]
    %s109 = sadd.s32 %s97, 3
    %s110 = sld [smem:[#allocation3 + %s109]]
    %s111 = scalar_lea.vmem [#allocation4], %s110
    %v112 = vld [vmem:[%s111] sm:$0x1]
    %s113 = sadd.s32 %s97, 4
    %s114 = sld [smem:[#allocation3 + %s113]]
    %s115 = scalar_lea.vmem [#allocation4], %s114
    %v116 = vld [vmem:[%s115] sm:$0x1]
    %s117 = sadd.s32 %s97, 5
    %s118 = sld [smem:[#allocation3 + %s117]]
    %s119 = scalar_lea.vmem [#allocation4], %s118
    %v120 = vld [vmem:[%s119] sm:$0x1]
    %s121 = sadd.s32 %s97, 6
    %s122 = sld [smem:[#allocation3 + %s121]]
    %s123 = scalar_lea.vmem [#allocation4], %s122
    %v124 = vld [vmem:[%s123] sm:$0x1]
    %s125 = sadd.s32 %s97, 7
    %s126 = sld [smem:[#allocation3 + %s125]]
    %s127 = scalar_lea.vmem [#allocation4], %s126
    %v128 = vld [vmem:[%s127] sm:$0x1]
    %v130 = vrot.slane %v104, 7
    %v133 = vrot.slane %v108, 6
    %v136 = vrot.slane %v112, 5
    %v139 = vrot.slane %v116, 4
    %v142 = vrot.slane %v120, 3
    %v145 = vrot.slane %v124, 2
    %v148 = vrot.slane %v128, 1
    %v150 = vsel %vm82, %v100, %v130
    %v151 = vsel %vm84, %v150, %v133
    %v152 = vsel %vm86, %v151, %v136
    %v153 = vsel %vm88, %v152, %v139
    %v154 = vsel %vm90, %v153, %v142
    %v155 = vsel %vm92, %v154, %v145
    %v156 = vsel %vm94, %v155, %v148
    %s157 = scalar_lea.vmem [#allocation7], 8
    %158 = vst [vmem:[%s157] sm:$0xff] %v156
    %v159 = vld [vmem:[#allocation7] sm:$0xff]
    %v160 = vld [vmem:[#allocation7 + $0x8] sm:$0xff]
    %v161 = vmul.f32 %v159, 11.313708
    %v162 = vmul.f32 %v160, 11.313708
    %163 = vst [vmem:[#allocation7] sm:$0xff] %v161
    %164 = vst [vmem:[#allocation7 + $0x8] sm:$0xff] %v162
    // Predicated region
    $region10: #{tpu_custom_call.1} parent=1 // pred_check
      _
    $region11: #{tpu_custom_call.1} parent=1 // pred_check_branch
      %166 = sbr.rel (0) target = $region13
    $region12: #{tpu_custom_call.1} parent=1 // pred_region
      %s168 = ssub.s32 256, 256
      %169 = vsyncadd [#allocation6], %s168
      %s170 = sshll.u32 [#allocation7], 4
      %s171 = int_to_ptr.vmem [resolvable:$true] %s170
      %176 = dma.vmem_to_hbm [thread:$0]  %s171, 256, %s2, [#allocation6], 128, 128, 8
    $region13: #{tpu_custom_call.1} parent=1 // pred_fallthru
      _
    // Predicated region
    $region14: #{tpu_custom_call.1} parent=1 // pred_check
      _
    $region15: #{tpu_custom_call.1} parent=1 // pred_check_branch
      %178 = sbr.rel (0) target = $region17
    $region16: #{tpu_custom_call.1} parent=1 // pred_region
      %179 = dma.done [#allocation6], 256
    $region17: #{tpu_custom_call.1} parent=1 // pred_fallthru
      _
    %180 = vsyncpa [#allocation5], 1
    %181 = vsyncpa [#allocation6], 1

</llo_original>
